<compile_context>
chip_gen: v6e
topology: v6e:2x2x1
jax: 0.10.0
libtpu: 0.0.40
codegen_flags: <defaults>
</compile_context>

<pallas_src>
import functools

import jax
import jax.numpy as jnp
from jax.experimental import pallas as pl
from jax.experimental.pallas import tpu as pltpu

_INV_SQRT2 = 0.7071067811865476


def _gelu(x, approximate):
    if approximate:
        # tanh-based GELU -> EUP slot (VALU relief); NOT bit-exact vs torch.nn.GELU()
        return jax.nn.gelu(x, approximate=True)
    # exact erf-based GELU, matches torch.nn.GELU() default
    return x * 0.5 * (1.0 + jax.lax.erf(x * jnp.float32(_INV_SQRT2)))


def make_chebnet_kernel(K, N, bb, Fin, Fh, Fout_p, mm_dtype, gelu_approximate):
    def cheb_fill(feat_ref, A, deg, xin, F):
        """Write [T_0 x | T_1 x | ... | T_K x] slabs into feat_ref (bb, N, (K+1)*F).

        L @ v is evaluated batched as deg * v - A @ v (L = D - A), so D / L are
        never materialized.  The recurrence state stays in f32; only the MXU
        operands are cast to mm_dtype.
        """
        feat_ref[:, :, 0:F] = xin
        if K >= 1:
            x_prev = xin
            x_cur = deg * xin - jnp.einsum(
                'bij,bjf->bif', A, xin.astype(mm_dtype),
                preferred_element_type=jnp.float32)
            feat_ref[:, :, F:2 * F] = x_cur
            for k in range(2, K + 1):
                Lx = deg * x_cur - jnp.einsum(
                    'bij,bjf->bif', A, x_cur.astype(mm_dtype),
                    preferred_element_type=jnp.float32)
                x_next = 2.0 * Lx - x_prev
                feat_ref[:, :, k * F:(k + 1) * F] = x_next
                x_prev, x_cur = x_cur, x_next

    def kernel(adj_ref, deg_ref, x_ref, w1_ref, w2_ref, out_ref,
               feat1_ref, feat2_ref):
        # adj_ref: (bb, N, N) already in mm_dtype (cast at the call boundary)
        # deg_ref: (bb, N, 1) f32, precomputed column sums (== torch.sum(A, dim=1))
        # x_ref:   (bb, N, Fin)
        # w1_ref:  ((K+1)*Fin, Fh)        fused layout, mm_dtype, shared across steps
        # w2_ref:  ((K+1)*Fh, Fout_p)     fused layout, mm_dtype, lane-padded
        # out_ref: (bb, N, Fout_p)
        # feat1_ref / feat2_ref: f32 VMEM scratch feature slabs
        A = adj_ref[...]
        deg = deg_ref[...]

        # ---- layer 1: batched Chebyshev features, then ONE fused weight matmul ----
        cheb_fill(feat1_ref, A, deg, x_ref[...].astype(jnp.float32), Fin)
        xt1 = feat1_ref[...].reshape(bb * N, (K + 1) * Fin)
        h = jnp.dot(xt1.astype(mm_dtype), w1_ref[...],
                    preferred_element_type=jnp.float32)          # (bb*N, Fh) f32
        h = _gelu(h, gelu_approximate)

        # ---- layer 2: shares A / deg with layer 1 ----
        cheb_fill(feat2_ref, A, deg, h.reshape(bb, N, Fh), Fh)
        xt2 = feat2_ref[...].reshape(bb * N, (K + 1) * Fh)
        y = jnp.dot(xt2.astype(mm_dtype), w2_ref[...],
                    preferred_element_type=jnp.float32)          # (bb*N, Fout_p) f32
        out_ref[...] = y.reshape(bb, N, Fout_p).astype(out_ref.dtype)  # lane-dense store

    return kernel


def _physical_vmem_bytes():
    try:
        return int(pltpu.get_tpu_info().vmem_capacity_bytes)
    except Exception:
        return 64 * 1024 * 1024  # conservative fallback == v7x per-TensorCore VMEM


def _lane_pad(n):
    return max(128, ((n + 127) // 128) * 128)


def _vmem_bytes_per_step(bb, N, Fin, Fh, Fout_p, K, mm_bytes, io_bytes):
    """Rough per-grid-step VMEM footprint (double-buffered I/O + scratch + intermediates)."""
    adj = 2 * bb * N * _lane_pad(N) * mm_bytes            # double-buffered adjacency block
    x_in = 2 * bb * N * _lane_pad(Fin) * io_bytes
    deg = 2 * bb * N * 128 * 4
    w = ((K + 1) * Fin * _lane_pad(Fh) + (K + 1) * Fh * Fout_p) * mm_bytes
    feats = bb * N * (_lane_pad((K + 1) * Fin) + _lane_pad((K + 1) * Fh)) * 4
    interm = bb * N * (_lane_pad(Fh) + Fout_p) * 4        # h / y live f32 values (approx)
    out = 2 * bb * N * Fout_p * io_bytes
    return adj + x_in + deg + w + feats + interm + out


@functools.partial(
    jax.jit,
    static_argnames=("K", "batch_block", "matmul_dtype", "gelu_approximate"))
def chebnet_forward(x, adj, w1, w2, *, K, batch_block=None,
                    matmul_dtype=jnp.float32, gelu_approximate=False):
    """x: (B,N,Fin), adj: (B,N,N), w1: (K+1,Fin,Fh), w2: (K+1,Fh,Fout) -> (B,N,Fout)."""
    B, N, Fin = x.shape
    Fh = w1.shape[2]
    Fout = w2.shape[2]
    # Lane-dense output: pad layer-2 output columns to a multiple of 128 so kernel
    # stores are full, unmasked vector stores.  Padding is sliced off afterwards.
    Fout_p = ((Fout + 127) // 128) * 128

    mm_bytes = jnp.dtype(matmul_dtype).itemsize
    io_bytes = jnp.dtype(x.dtype).itemsize
    phys_vmem = _physical_vmem_bytes()
    budget = int(0.70 * phys_vmem)

    if batch_block is None:
        divisors = [d for d in range(1, B + 1) if B % d == 0]
        fitting = [d for d in divisors
                   if _vmem_bytes_per_step(d, N, Fin, Fh, Fout_p, K,
                                           mm_bytes, io_bytes) <= budget]
        bb = max(fitting) if fitting else 1
        # Keep >= 2 grid steps when it is cheap so both v7x TensorCores get work
        # (on v5e/v6e the grid is a serial loop, so this only costs ~0.35us overhead).
        if bb == B and B >= 2 and B % 2 == 0:
            bb = B // 2
        batch_block = bb
    assert B % batch_block == 0, "batch_block must divide the batch size"
    G = B // batch_block

    # Degree = column sums (matches torch.sum(A, dim=1) / the reference), computed
    # once in f32 in the wrapper -- never re-derived with an in-kernel MXU dot.
    deg = jnp.sum(adj.astype(jnp.float32), axis=1)[..., None]          # (B, N, 1)

    # Cast the big operands to the matmul dtype AT THE CALL BOUNDARY so the BlockSpec
    # DMAs and the double-buffered VMEM blocks are actually that dtype.
    adj_mm = adj.astype(matmul_dtype)
    w1_2d = w1.reshape((K + 1) * Fin, Fh).astype(matmul_dtype)         # fused layout
    w2_2d = w2.reshape((K + 1) * Fh, Fout).astype(matmul_dtype)
    if Fout_p != Fout:
        w2_2d = jnp.pad(w2_2d, ((0, 0), (0, Fout_p - Fout)))

    est = _vmem_bytes_per_step(batch_block, N, Fin, Fh, Fout_p, K, mm_bytes, io_bytes)
    vmem_limit = int(min(0.9 * phys_vmem, max(32 * 1024 * 1024, 1.5 * est)))

    kernel = make_chebnet_kernel(K, N, batch_block, Fin, Fh, Fout_p,
                                 matmul_dtype, gelu_approximate)
    out = pl.pallas_call(
        kernel,
        out_shape=jax.ShapeDtypeStruct((B, N, Fout_p), x.dtype),
        grid_spec=pltpu.PrefetchScalarGridSpec(
            num_scalar_prefetch=0,
            grid=(G,),
            in_specs=[
                pl.BlockSpec((batch_block, N, N), lambda g: (g, 0, 0)),    # adjacency (mm dtype)
                pl.BlockSpec((batch_block, N, 1), lambda g: (g, 0, 0)),    # precomputed degree
                pl.BlockSpec((batch_block, N, Fin), lambda g: (g, 0, 0)),  # node features
                pl.BlockSpec(((K + 1) * Fin, Fh), lambda g: (0, 0)),       # W1 (fused)
                pl.BlockSpec(((K + 1) * Fh, Fout_p), lambda g: (0, 0)),    # W2 (fused + pad)
            ],
            out_specs=pl.BlockSpec((batch_block, N, Fout_p), lambda g: (g, 0, 0)),
            scratch_shapes=[
                pltpu.VMEM((batch_block, N, (K + 1) * Fin), jnp.float32),  # layer-1 T_k slabs
                pltpu.VMEM((batch_block, N, (K + 1) * Fh), jnp.float32),   # layer-2 T_k slabs
            ],
        ),
        compiler_params=pltpu.CompilerParams(
            dimension_semantics=("parallel",),
            vmem_limit_bytes=vmem_limit,
        ),
    )(adj_mm, deg, x, w1_2d, w2_2d)

    return out[:, :, :Fout]


def chebnet_ref(x, adj, w1, w2, K):
    """Pure-JAX reference mirroring the PyTorch module exactly."""
    A = adj
    D = jnp.sum(A, axis=1)                       # torch.sum(A, dim=1)
    L = jax.vmap(jnp.diag)(D) - A                # diag_embed(D) - A
    B, N, _ = L.shape

    def layer(xin, w):
        T_k = [jnp.broadcast_to(jnp.eye(N, dtype=L.dtype), (B, N, N)), L]
        for _ in range(2, K + 1):
            T_k.append(2.0 * jnp.einsum('bij,bjk->bik', L, T_k[-1]) - T_k[-2])
        x_tilde = jnp.stack(
            [jnp.einsum('bij,bjf->bif', T_k[k], xin) for k in range(K + 1)], axis=1)
        return jnp.einsum('bkni,kio->bno', x_tilde, w)

    h = jax.nn.gelu(layer(x, w1), approximate=False)
    return layer(h, w2)


def xavier_normal(key, shape):
    # torch.nn.init.xavier_normal_ on a (k+1, in, out) tensor:
    # fan_in = in * out, fan_out = (k+1) * out  (PyTorch fan rules for ndim > 2)
    fan_in = shape[1] * shape[2]
    fan_out = shape[0] * shape[2]
    std = (2.0 / (fan_in + fan_out)) ** 0.5
    return std * jax.random.normal(key, shape, dtype=jnp.float32)


if __name__ == "__main__":
    B, N = 2, 16
    in_features, hidden_features, out_features = 8, 32, 16
    K = 2  # Chebyshev order

    key = jax.random.PRNGKey(0)
    k_x, k_a, k_w1, k_w2 = jax.random.split(key, 4)

    x = jax.random.normal(k_x, (B, N, in_features), dtype=jnp.float32)
    adj = jax.random.uniform(k_a, (B, N, N), dtype=jnp.float32)   # dense weighted adjacency
    w1 = xavier_normal(k_w1, (K + 1, in_features, hidden_features))
    w2 = xavier_normal(k_w2, (K + 1, hidden_features, out_features))

    out = chebnet_forward(x, adj, w1, w2, K=K)
    out = jax.block_until_ready(out)

    ref = chebnet_ref(x, adj, w1, w2, K)
    assert out.shape == (B, N, out_features)
    max_err = jnp.max(jnp.abs(out - ref))
    assert jnp.allclose(out, ref, atol=1e-3, rtol=1e-3), f"max err {max_err}"

    print("KERNEL_OK")
</pallas_src>

<mosaic_0001>
module attributes {stable_mosaic.version = 11 : i64} {
  func.func @kernel(%arg0: i32, %arg1: memref<1x16x16xf32, #tpu.memory_space<vmem>>, %arg2: memref<1x16x1xf32, #tpu.memory_space<vmem>>, %arg3: memref<1x16x8xf32, #tpu.memory_space<vmem>>, %arg4: memref<24x32xf32, #tpu.memory_space<vmem>>, %arg5: memref<96x128xf32, #tpu.memory_space<vmem>>, %arg6: memref<1x16x128xf32, #tpu.memory_space<vmem>>, %arg7: memref<1x16x24xf32, #tpu.memory_space<vmem>>, %arg8: memref<1x16x96xf32, #tpu.memory_space<vmem>>) attributes {dimension_semantics = [#tpu.dimension_semantics<parallel>], iteration_bounds = array<i64: 2>, scalar_prefetch = 0 : i64, scratch_operands = 2 : i64, tpu.core_type = #tpu.core_type<tc>, window_params = [{transform_indices = @transform_0, window_bounds = array<i64: 1, 16, 16>}, {transform_indices = @transform_1, window_bounds = array<i64: 1, 16, 1>}, {transform_indices = @transform_2, window_bounds = array<i64: 1, 16, 8>}, {pipeline_mode = #tpu.pipeline_mode<synchronous>, transform_indices = @transform_3, window_bounds = array<i64: 24, 32>}, {pipeline_mode = #tpu.pipeline_mode<synchronous>, transform_indices = @transform_4, window_bounds = array<i64: 96, 128>}, {transform_indices = @transform_5, window_bounds = array<i64: 1, 16, 128>}]} {
    %c0 = arith.constant 0 : index
    %c0_0 = arith.constant 0 : index
    %c0_1 = arith.constant 0 : index
    %0 = vector.load %arg1[%c0, %c0_0, %c0_1] : memref<1x16x16xf32, #tpu.memory_space<vmem>>, vector<1x16x16xf32>
    %c0_2 = arith.constant 0 : index
    %c0_3 = arith.constant 0 : index
    %c0_4 = arith.constant 0 : index
    %1 = vector.load %arg2[%c0_2, %c0_3, %c0_4] : memref<1x16x1xf32, #tpu.memory_space<vmem>>, vector<1x16x1xf32>
    %c0_5 = arith.constant 0 : index
    %c0_6 = arith.constant 0 : index
    %c0_7 = arith.constant 0 : index
    %2 = vector.load %arg3[%c0_5, %c0_6, %c0_7] : memref<1x16x8xf32, #tpu.memory_space<vmem>>, vector<1x16x8xf32>
    %c0_8 = arith.constant 0 : index
    %c0_9 = arith.constant 0 : index
    %c0_10 = arith.constant 0 : index
    %3 = vector.load %arg7[%c0_8, %c0_9, %c0_10] : memref<1x16x24xf32, #tpu.memory_space<vmem>>, vector<1x16x8xf32>
    tpu.vector_store %arg7[%c0_8, %c0_9, %c0_10], %2 {strides = array<i32>} : memref<1x16x24xf32, #tpu.memory_space<vmem>>, vector<1x16x8xf32>,
    %4 = vector.broadcast %1 : vector<1x16x1xf32> to vector<1x16x8xf32>
    %5 = arith.mulf %4, %2 : vector<1x16x8xf32>
    "tpu.trace_start"() <{level = 10 : i32, message = "bij,bjf->bif"}> : () -> ()
    %cst = arith.constant dense<0.000000e+00> : vector<1x16x8xf32>
    %6 = tpu.matmul %0, %2, %cst {dimension_numbers = #tpu.dot_dimension_numbers<[2], [1], [1], [2], [0, 0, 0, 1, 1, 2], [0], [0]>} : vector<1x16x16xf32>, vector<1x16x8xf32>, vector<1x16x8xf32> -> vector<1x16x8xf32>
    "tpu.trace_stop"() : () -> ()
    %7 = arith.subf %5, %6 : vector<1x16x8xf32>
    %c0_11 = arith.constant 0 : index
    %c0_12 = arith.constant 0 : index
    %c8 = arith.constant 8 : index
    %8 = vector.load %arg7[%c0_11, %c0_12, %c8] : memref<1x16x24xf32, #tpu.memory_space<vmem>>, vector<1x16x8xf32>
    tpu.vector_store %arg7[%c0_11, %c0_12, %c8], %7 {strides = array<i32>} : memref<1x16x24xf32, #tpu.memory_space<vmem>>, vector<1x16x8xf32>,
    %9 = vector.broadcast %1 : vector<1x16x1xf32> to vector<1x16x8xf32>
    %10 = arith.mulf %9, %7 : vector<1x16x8xf32>
    "tpu.trace_start"() <{level = 10 : i32, message = "bij,bjf->bif"}> : () -> ()
    %cst_13 = arith.constant dense<0.000000e+00> : vector<1x16x8xf32>
    %11 = tpu.matmul %0, %7, %cst_13 {dimension_numbers = #tpu.dot_dimension_numbers<[2], [1], [1], [2], [0, 0, 0, 1, 1, 2], [0], [0]>} : vector<1x16x16xf32>, vector<1x16x8xf32>, vector<1x16x8xf32> -> vector<1x16x8xf32>
    "tpu.trace_stop"() : () -> ()
    %12 = arith.subf %10, %11 : vector<1x16x8xf32>
    %cst_14 = arith.constant 2.000000e+00 : f32
    %13 = vector.broadcast %cst_14 : f32 to vector<1x16x8xf32>
    %14 = arith.mulf %13, %12 : vector<1x16x8xf32>
    %15 = arith.subf %14, %2 : vector<1x16x8xf32>
    %c0_15 = arith.constant 0 : index
    %c0_16 = arith.constant 0 : index
    %c16 = arith.constant 16 : index
    %16 = vector.load %arg7[%c0_15, %c0_16, %c16] : memref<1x16x24xf32, #tpu.memory_space<vmem>>, vector<1x16x8xf32>
    tpu.vector_store %arg7[%c0_15, %c0_16, %c16], %15 {strides = array<i32>} : memref<1x16x24xf32, #tpu.memory_space<vmem>>, vector<1x16x8xf32>,
    %c0_17 = arith.constant 0 : index
    %c0_18 = arith.constant 0 : index
    %c0_19 = arith.constant 0 : index
    %17 = vector.load %arg7[%c0_17, %c0_18, %c0_19] : memref<1x16x24xf32, #tpu.memory_space<vmem>>, vector<1x16x24xf32>
    %18 = vector.shape_cast %17 : vector<1x16x24xf32> to vector<16x24xf32>
    %c0_20 = arith.constant 0 : index
    %c0_21 = arith.constant 0 : index
    %19 = vector.load %arg4[%c0_20, %c0_21] : memref<24x32xf32, #tpu.memory_space<vmem>>, vector<24x32xf32>
    %cst_22 = arith.constant dense<0.000000e+00> : vector<16x32xf32>
    %20 = tpu.matmul %18, %19, %cst_22 {dimension_numbers = #tpu.dot_dimension_numbers<[1], [0], [0], [1], [0, 0, 1, 1], [], []>} : vector<16x24xf32>, vector<24x32xf32>, vector<16x32xf32> -> vector<16x32xf32>
    %cst_23 = arith.constant 5.000000e-01 : f32
    %21 = vector.broadcast %cst_23 : f32 to vector<16x32xf32>
    %22 = arith.mulf %20, %21 : vector<16x32xf32>
    %cst_24 = arith.constant 0.707106769 : f32
    %23 = vector.broadcast %cst_24 : f32 to vector<16x32xf32>
    %24 = arith.mulf %20, %23 : vector<16x32xf32>
    %25 = math.erf %24 : vector<16x32xf32>
    %cst_25 = arith.constant 1.000000e+00 : f32
    %26 = vector.broadcast %cst_25 : f32 to vector<16x32xf32>
    %27 = arith.addf %26, %25 : vector<16x32xf32>
    %28 = arith.mulf %22, %27 : vector<16x32xf32>
    %29 = vector.shape_cast %28 : vector<16x32xf32> to vector<1x16x32xf32>
    %c0_26 = arith.constant 0 : index
    %c0_27 = arith.constant 0 : index
    %c0_28 = arith.constant 0 : index
    %30 = vector.load %arg8[%c0_26, %c0_27, %c0_28] : memref<1x16x96xf32, #tpu.memory_space<vmem>>, vector<1x16x32xf32>
    tpu.vector_store %arg8[%c0_26, %c0_27, %c0_28], %29 {strides = array<i32>} : memref<1x16x96xf32, #tpu.memory_space<vmem>>, vector<1x16x32xf32>,
    %31 = vector.broadcast %1 : vector<1x16x1xf32> to vector<1x16x32xf32>
    %32 = arith.mulf %31, %29 : vector<1x16x32xf32>
    "tpu.trace_start"() <{level = 10 : i32, message = "bij,bjf->bif"}> : () -> ()
    %cst_29 = arith.constant dense<0.000000e+00> : vector<1x16x32xf32>
    %33 = tpu.matmul %0, %29, %cst_29 {dimension_numbers = #tpu.dot_dimension_numbers<[2], [1], [1], [2], [0, 0, 0, 1, 1, 2], [0], [0]>} : vector<1x16x16xf32>, vector<1x16x32xf32>, vector<1x16x32xf32> -> vector<1x16x32xf32>
    "tpu.trace_stop"() : () -> ()
    %34 = arith.subf %32, %33 : vector<1x16x32xf32>
    %c0_30 = arith.constant 0 : index
    %c0_31 = arith.constant 0 : index
    %c32 = arith.constant 32 : index
    %35 = vector.load %arg8[%c0_30, %c0_31, %c32] : memref<1x16x96xf32, #tpu.memory_space<vmem>>, vector<1x16x32xf32>
    tpu.vector_store %arg8[%c0_30, %c0_31, %c32], %34 {strides = array<i32>} : memref<1x16x96xf32, #tpu.memory_space<vmem>>, vector<1x16x32xf32>,
    %36 = vector.broadcast %1 : vector<1x16x1xf32> to vector<1x16x32xf32>
    %37 = arith.mulf %36, %34 : vector<1x16x32xf32>
    "tpu.trace_start"() <{level = 10 : i32, message = "bij,bjf->bif"}> : () -> ()
    %cst_32 = arith.constant dense<0.000000e+00> : vector<1x16x32xf32>
    %38 = tpu.matmul %0, %34, %cst_32 {dimension_numbers = #tpu.dot_dimension_numbers<[2], [1], [1], [2], [0, 0, 0, 1, 1, 2], [0], [0]>} : vector<1x16x16xf32>, vector<1x16x32xf32>, vector<1x16x32xf32> -> vector<1x16x32xf32>
    "tpu.trace_stop"() : () -> ()
    %39 = arith.subf %37, %38 : vector<1x16x32xf32>
    %cst_33 = arith.constant 2.000000e+00 : f32
    %40 = vector.broadcast %cst_33 : f32 to vector<1x16x32xf32>
    %41 = arith.mulf %40, %39 : vector<1x16x32xf32>
    %42 = arith.subf %41, %29 : vector<1x16x32xf32>
    %c0_34 = arith.constant 0 : index
    %c0_35 = arith.constant 0 : index
    %c64 = arith.constant 64 : index
    %43 = vector.load %arg8[%c0_34, %c0_35, %c64] : memref<1x16x96xf32, #tpu.memory_space<vmem>>, vector<1x16x32xf32>
    tpu.vector_store %arg8[%c0_34, %c0_35, %c64], %42 {strides = array<i32>} : memref<1x16x96xf32, #tpu.memory_space<vmem>>, vector<1x16x32xf32>,
    %c0_36 = arith.constant 0 : index
    %c0_37 = arith.constant 0 : index
    %c0_38 = arith.constant 0 : index
    %44 = vector.load %arg8[%c0_36, %c0_37, %c0_38] : memref<1x16x96xf32, #tpu.memory_space<vmem>>, vector<1x16x96xf32>
    %45 = vector.shape_cast %44 : vector<1x16x96xf32> to vector<16x96xf32>
    %c0_39 = arith.constant 0 : index
    %c0_40 = arith.constant 0 : index
    %46 = vector.load %arg5[%c0_39, %c0_40] : memref<96x128xf32, #tpu.memory_space<vmem>>, vector<96x128xf32>
    %cst_41 = arith.constant dense<0.000000e+00> : vector<16x128xf32>
    %47 = tpu.matmul %45, %46, %cst_41 {dimension_numbers = #tpu.dot_dimension_numbers<[1], [0], [0], [1], [0, 0, 1, 1], [], []>} : vector<16x96xf32>, vector<96x128xf32>, vector<16x128xf32> -> vector<16x128xf32>
    %48 = vector.shape_cast %47 : vector<16x128xf32> to vector<1x16x128xf32>
    %c0_42 = arith.constant 0 : index
    %c0_43 = arith.constant 0 : index
    %c0_44 = arith.constant 0 : index
    %49 = vector.load %arg6[%c0_42, %c0_43, %c0_44] : memref<1x16x128xf32, #tpu.memory_space<vmem>>, vector<1x16x128xf32>
    tpu.vector_store %arg6[%c0_42, %c0_43, %c0_44], %48 {strides = array<i32>} : memref<1x16x128xf32, #tpu.memory_space<vmem>>, vector<1x16x128xf32>,
    return
  }
  func.func @transform_0(%arg0: i32) -> (i32, i32, i32) {
    %c0_i32 = arith.constant 0 : i32
    %c0_i32_0 = arith.constant 0 : i32
    %c0_i32_1 = arith.constant 0 : i32
    return %arg0, %c0_i32, %c0_i32_0 : i32, i32, i32
  }
  func.func @transform_1(%arg0: i32) -> (i32, i32, i32) {
    %c0_i32 = arith.constant 0 : i32
    %c0_i32_0 = arith.constant 0 : i32
    %c0_i32_1 = arith.constant 0 : i32
    return %arg0, %c0_i32, %c0_i32_0 : i32, i32, i32
  }
  func.func @transform_2(%arg0: i32) -> (i32, i32, i32) {
    %c0_i32 = arith.constant 0 : i32
    %c0_i32_0 = arith.constant 0 : i32
    %c0_i32_1 = arith.constant 0 : i32
    return %arg0, %c0_i32, %c0_i32_0 : i32, i32, i32
  }
  func.func @transform_3(%arg0: i32) -> (i32, i32) {
    %c0_i32 = arith.constant 0 : i32
    %c0_i32_0 = arith.constant 0 : i32
    %c0_i32_1 = arith.constant 0 : i32
    return %c0_i32, %c0_i32_0 : i32, i32
  }
  func.func @transform_4(%arg0: i32) -> (i32, i32) {
    %c0_i32 = arith.constant 0 : i32
    %c0_i32_0 = arith.constant 0 : i32
    %c0_i32_1 = arith.constant 0 : i32
    return %c0_i32, %c0_i32_0 : i32, i32
  }
  func.func @transform_5(%arg0: i32) -> (i32, i32, i32) {
    %c0_i32 = arith.constant 0 : i32
    %c0_i32_0 = arith.constant 0 : i32
    %c0_i32_1 = arith.constant 0 : i32
    return %arg0, %c0_i32, %c0_i32_0 : i32, i32, i32
  }
}

</mosaic_0001>

<llo_original>
// kernel: chebnet_forward.1
$region0: #{chebnet_forward.1}
  #allocation0 [shape = 'u32[]', space=smem, size = 0x4, offset = 0x4, fixed_abs, tag = 'smem constant byte address 0x4 - core index']
  #allocation1 [shape = 'u32[144,128]{1,0:T(1,128)}', space=vmem, size = 0x12000, scoped, tag = 'internal scratch']
  #allocation2 [shape = 'f32[1,16,24]{2,1,0:T(8,128)}', space=vmem, size = 0x2000, scoped, tag = 'scratch operand']
  #allocation3 [shape = 'f32[1,16,96]{2,1,0:T(8,128)}', space=vmem, size = 0x2000, scoped, tag = 'scratch operand']
  %s0 = inlined_call_operand.vmem [shape: f32[2,16,16], index: 0, kind: input, shape index: {}]
  %s1 = inlined_call_operand.vmem [shape: f32[2,16,1], index: 1, kind: input, shape index: {}]
  %s2 = inlined_call_operand.vmem [shape: f32[2,16,8], index: 2, kind: input, shape index: {}]
  %s3 = inlined_call_operand.vmem [shape: f32[24,32], index: 3, kind: input, shape index: {}]
  %s4 = inlined_call_operand.vmem [shape: f32[96,128], index: 4, kind: input, shape index: {}]
  %s5 = inlined_call_operand.hbm [shape: f32[2,16,128], index: 5, kind: output, shape index: {}]
  %s6 = sld [smem:[#allocation0]]
  $region53: #{chebnet_forward.1} parent=0
    _
  %s8 = ssub.s32 1, %s6
  %s9 = scalar_select 0, %s8, %s6
  $region1: #{chebnet_forward.1} parent=0
    #allocation4 [shape = 'u8[16384]{0}', space=vmem, size = 0x4000, scoped, tag = 'output window, operand 0']
    #allocation5 [shape = 's32[2]{0}', space=sflag, size = 0x8, scoped, tag = 'scoped memory for chebnet_forward.1']
    %10 = vsyncpa [#allocation5], 0
    %s11 = scalar_lea.sflag [#allocation5], 1
    %12 = vsyncpa %s11, 0
    loop: start=0, step=1, limit=4
    $region2: #{chebnet_forward.1} parent=1 // loop_pre_header
      _
    $region3: #{chebnet_forward.1} parent=1 // loop_header
      %s14 = sphi 0, %s18
      %p15 = scmp.ge.s32.totalorder %s14, 4
      %s24 = sphi 0, %s26
      %s27 = sphi 0, %s24
      %s28 = sphi 0, %s27
      %s44 = sphi 0, %s28
      %s50 = sphi 0, %s52
      %s53 = sphi 0, %s50
      %s54 = sphi 0, %s53
      %s70 = sphi 0, %s54
      %s76 = sphi 0, %s78
      %s79 = sphi 0, %s76
      %s80 = sphi 0, %s79
      %s96 = sphi 0, %s80
      %s100 = sphi 0, %s100
      %s102 = sphi 0, %s100
      %s103 = sphi 0, %s102
      %s117 = sphi 0, %s103
      %s121 = sphi 0, %s121
      %s123 = sphi 0, %s121
      %s124 = sphi 0, %s123
      %s138 = sphi 0, %s124
      %s144 = sphi 0, %s146
      %s147 = sphi 0, %s144
      %s148 = sphi 0, %s147
      %s164 = sphi 0, %s148
    $region4: #{chebnet_forward.1} parent=1 // loop_header_branch
      %17 = sbr.rel (%p15) target = $region8
    $region5: #{chebnet_forward.1} parent=1 // loop_body
      %s19 = ssub.s32 %s14, 1
      %s20 = ssub.s32 %s14, 2
      %s21 = sadd.s32 %s14, 1
      %s22 = ssub.s32 %s14, %s21
      %p23 = scmp.eq.s32.totalorder %s22, 0
      %s25 = sadd.s32 %s24, 1
      %s26 = scalar_select %p23, %s24, %s25
      %p29 = pneg %p23
      %p30 = scmp.eq.s32.totalorder %s14, 1
      %p31 = por %p29, %p30
      %p32 = scmp.ne.s32.totalorder %s24, %s27
      %p33 = scmp.eq.s32.totalorder %s14, 0
      %p34 = por %p32, %p33
      %p35 = scmp.ne.s32.totalorder %s24, %s27
      %p36 = scmp.eq.s32.totalorder %s19, 1
      %p37 = por %p35, %p36
      %p38 = scmp.ne.s32.totalorder %s27, %s28
      %p39 = scmp.eq.s32.totalorder %s19, 0
      %p40 = por %p38, %p39
      %p41 = scmp.ne.s32.totalorder %s27, %s28
      %p42 = scmp.eq.s32.totalorder %s20, 1
      %p43 = por %p41, %p42
      %p45 = scmp.ne.s32.totalorder %s28, %s44
      %p46 = scmp.eq.s32.totalorder %s20, 0
      %p47 = por %p45, %p46
      %s48 = ssub.s32 %s14, %s21
      %p49 = scmp.eq.s32.totalorder %s48, 0
      %s51 = sadd.s32 %s50, 1
      %s52 = scalar_select %p49, %s50, %s51
      %p55 = pneg %p49
      %p56 = scmp.eq.s32.totalorder %s14, 1
      %p57 = por %p55, %p56
      %p58 = scmp.ne.s32.totalorder %s50, %s53
      %p59 = scmp.eq.s32.totalorder %s14, 0
      %p60 = por %p58, %p59
      %p61 = scmp.ne.s32.totalorder %s50, %s53
      %p62 = scmp.eq.s32.totalorder %s19, 1
      %p63 = por %p61, %p62
      %p64 = scmp.ne.s32.totalorder %s53, %s54
      %p65 = scmp.eq.s32.totalorder %s19, 0
      %p66 = por %p64, %p65
      %p67 = scmp.ne.s32.totalorder %s53, %s54
      %p68 = scmp.eq.s32.totalorder %s20, 1
      %p69 = por %p67, %p68
      %p71 = scmp.ne.s32.totalorder %s54, %s70
      %p72 = scmp.eq.s32.totalorder %s20, 0
      %p73 = por %p71, %p72
      %s74 = ssub.s32 %s14, %s21
      %p75 = scmp.eq.s32.totalorder %s74, 0
      %s77 = sadd.s32 %s76, 1
      %s78 = scalar_select %p75, %s76, %s77
      %p81 = pneg %p75
      %p82 = scmp.eq.s32.totalorder %s14, 1
      %p83 = por %p81, %p82
      %p84 = scmp.ne.s32.totalorder %s76, %s79
      %p85 = scmp.eq.s32.totalorder %s14, 0
      %p86 = por %p84, %p85
      %p87 = scmp.ne.s32.totalorder %s76, %s79
      %p88 = scmp.eq.s32.totalorder %s19, 1
      %p89 = por %p87, %p88
      %p90 = scmp.ne.s32.totalorder %s79, %s80
      %p91 = scmp.eq.s32.totalorder %s19, 0
      %p92 = por %p90, %p91
      %p93 = scmp.ne.s32.totalorder %s79, %s80
      %p94 = scmp.eq.s32.totalorder %s20, 1
      %p95 = por %p93, %p94
      %p97 = scmp.ne.s32.totalorder %s80, %s96
      %p98 = scmp.eq.s32.totalorder %s20, 0
      %p99 = por %p97, %p98
      %s101 = sadd.s32 %s100, 1
      %p104 = scmp.eq.s32.totalorder %s14, 1
      %p105 = scmp.ne.s32.totalorder %s100, %s102
      %p106 = scmp.eq.s32.totalorder %s14, 0
      %p107 = por %p105, %p106
      %p108 = scmp.ne.s32.totalorder %s100, %s102
      %p109 = scmp.eq.s32.totalorder %s19, 1
      %p110 = por %p108, %p109
      %p111 = scmp.ne.s32.totalorder %s102, %s103
      %p112 = scmp.eq.s32.totalorder %s19, 0
      %p113 = por %p111, %p112
      %p114 = scmp.ne.s32.totalorder %s102, %s103
      %p115 = scmp.eq.s32.totalorder %s20, 1
      %p116 = por %p114, %p115
      %p118 = scmp.ne.s32.totalorder %s103, %s117
      %p119 = scmp.eq.s32.totalorder %s20, 0
      %p120 = por %p118, %p119
      %s122 = sadd.s32 %s121, 1
      %p125 = scmp.eq.s32.totalorder %s14, 1
      %p126 = scmp.ne.s32.totalorder %s121, %s123
      %p127 = scmp.eq.s32.totalorder %s14, 0
      %p128 = por %p126, %p127
      %p129 = scmp.ne.s32.totalorder %s121, %s123
      %p130 = scmp.eq.s32.totalorder %s19, 1
      %p131 = por %p129, %p130
      %p132 = scmp.ne.s32.totalorder %s123, %s124
      %p133 = scmp.eq.s32.totalorder %s19, 0
      %p134 = por %p132, %p133
      %p135 = scmp.ne.s32.totalorder %s123, %s124
      %p136 = scmp.eq.s32.totalorder %s20, 1
      %p137 = por %p135, %p136
      %p139 = scmp.ne.s32.totalorder %s124, %s138
      %p140 = scmp.eq.s32.totalorder %s20, 0
      %p141 = por %p139, %p140
      %s142 = ssub.s32 %s14, %s21
      %p143 = scmp.eq.s32.totalorder %s142, 0
      %s145 = sadd.s32 %s144, 1
      %s146 = scalar_select %p143, %s144, %s145
      %p149 = pneg %p143
      %p150 = scmp.eq.s32.totalorder %s14, 1
      %p151 = por %p149, %p150
      %p152 = scmp.ne.s32.totalorder %s144, %s147
      %p153 = scmp.eq.s32.totalorder %s14, 0
      %p154 = por %p152, %p153
      %p155 = scmp.ne.s32.totalorder %s144, %s147
      %p156 = scmp.eq.s32.totalorder %s19, 1
      %p157 = por %p155, %p156
      %p158 = scmp.ne.s32.totalorder %s147, %s148
      %p159 = scmp.eq.s32.totalorder %s19, 0
      %p160 = por %p158, %p159
      %p161 = scmp.ne.s32.totalorder %s147, %s148
      %p162 = scmp.eq.s32.totalorder %s20, 1
      %p163 = por %p161, %p162
      %p165 = scmp.ne.s32.totalorder %s148, %s164
      %p166 = scmp.eq.s32.totalorder %s20, 0
      %p167 = por %p165, %p166
      %p168 = scmp.le.s32.totalorder 1, %s14
      %p169 = scmp.lt.s32.totalorder %s14, 3
      %p170 = pnand %p168, %p169
      %p171 = pneg %p170
      // Predicated region
      $region9: #{chebnet_forward.1} parent=5 // pred_check
        _
      $region10: #{chebnet_forward.1} parent=5 // pred_check_branch
        %173 = sbr.rel (%p170) target = $region12
      $region11: #{chebnet_forward.1} parent=5 // pred_region
        %s174 = ssub.s32 %s14, 1
        // Predicated region
        $region13: #{chebnet_forward.1} parent=11 // pred_check
          %p175 = pneg %p113
        $region14: #{chebnet_forward.1} parent=11 // pred_check_branch
          %177 = sbr.rel (%p175) target = $region16
        $region15: #{chebnet_forward.1} parent=11 // pred_region
          _
        $region16: #{chebnet_forward.1} parent=11 // pred_fallthru
          _
        // Predicated region
        $region17: #{chebnet_forward.1} parent=11 // pred_check
          %p178 = pneg %p134
        $region18: #{chebnet_forward.1} parent=11 // pred_check_branch
          %180 = sbr.rel (%p178) target = $region20
        $region19: #{chebnet_forward.1} parent=11 // pred_region
          _
        $region20: #{chebnet_forward.1} parent=11 // pred_fallthru
          _
      $region12: #{chebnet_forward.1} parent=5 // pred_fallthru
        _
      %p181 = scmp.lt.s32.totalorder %s14, 2
      // Predicated region
      $region21: #{chebnet_forward.1} parent=5 // pred_check
        %p182 = pneg %p181
      $region22: #{chebnet_forward.1} parent=5 // pred_check_branch
        %184 = sbr.rel (%p182) target = $region24
      $region23: #{chebnet_forward.1} parent=5 // pred_region
        // Predicated region
        $region25: #{chebnet_forward.1} parent=23 // pred_check
          %p185 = pneg %p34
        $region26: #{chebnet_forward.1} parent=23 // pred_check_branch
          %187 = sbr.rel (%p185) target = $region28
        $region27: #{chebnet_forward.1} parent=23 // pred_region
          %p188 = scmp.lt.s32.totalorder %s14, 1
          %s189 = scalar_select %p188, %s14, 1
          %s190 = smul.addr %s189, 2
          %s191 = smul.addr %s190, 8
          %s192 = scalar_lea.vmem %s0, %s191
        $region28: #{chebnet_forward.1} parent=23 // pred_fallthru
          _
        // Predicated region
        $region29: #{chebnet_forward.1} parent=23 // pred_check
          %p193 = pneg %p60
        $region30: #{chebnet_forward.1} parent=23 // pred_check_branch
          %195 = sbr.rel (%p193) target = $region32
        $region31: #{chebnet_forward.1} parent=23 // pred_region
          %p196 = scmp.lt.s32.totalorder %s14, 1
          %s197 = scalar_select %p196, %s14, 1
          %s198 = smul.addr %s197, 2
          %s199 = smul.addr %s198, 8
          %s200 = scalar_lea.vmem %s1, %s199
        $region32: #{chebnet_forward.1} parent=23 // pred_fallthru
          _
        // Predicated region
        $region33: #{chebnet_forward.1} parent=23 // pred_check
          %p201 = pneg %p86
        $region34: #{chebnet_forward.1} parent=23 // pred_check_branch
          %203 = sbr.rel (%p201) target = $region36
        $region35: #{chebnet_forward.1} parent=23 // pred_region
          %p204 = scmp.lt.s32.totalorder %s14, 1
          %s205 = scalar_select %p204, %s14, 1
          %s206 = smul.addr %s205, 2
          %s207 = smul.addr %s206, 8
          %s208 = scalar_lea.vmem %s2, %s207
        $region36: #{chebnet_forward.1} parent=23 // pred_fallthru
          _
      $region24: #{chebnet_forward.1} parent=5 // pred_fallthru
        _
      %p209 = scmp.le.s32.totalorder 1, %s14
      %p210 = scmp.lt.s32.totalorder %s14, 3
      %p211 = pnand %p209, %p210
      %p212 = pneg %p211
      // Predicated region
      $region37: #{chebnet_forward.1} parent=5 // pred_check
        _
      $region38: #{chebnet_forward.1} parent=5 // pred_check_branch
        %214 = sbr.rel (%p211) target = $region40
      $region39: #{chebnet_forward.1} parent=5 // pred_region
        %s215 = ssub.s32 %s14, 1
        %p216 = scmp.lt.s32.totalorder %s19, 1
        %s217 = scalar_select %p216, %s19, 1
        %s218 = smul.addr %s217, 2
        %s219 = smul.addr %s218, 8
        %s220 = scalar_lea.vmem %s0, %s219
        %p221 = pneg %p40
        %p222 = pneg %p37
        %p223 = scmp.lt.s32.totalorder %s19, 1
        %s224 = scalar_select %p223, %s19, 1
        %s225 = smul.addr %s224, 2
        %s226 = smul.addr %s225, 8
        %s227 = scalar_lea.vmem %s1, %s226
        %p228 = pneg %p66
        %p229 = pneg %p63
        %p230 = scmp.lt.s32.totalorder %s19, 1
        %s231 = scalar_select %p230, %s19, 1
        %s232 = smul.addr %s231, 2
        %s233 = smul.addr %s232, 8
        %s234 = scalar_lea.vmem %s2, %s233
        %p235 = pneg %p92
        %p236 = pneg %p89
        %p237 = pneg %p113
        %p238 = pneg %p110
        %p239 = pneg %p134
        %p240 = pneg %p131
        %p241 = pneg %p160
        %p242 = pneg %p157
        %s243 = sand.u32 %s147, 1
        %s244 = scalar_lea.sflag [#allocation5], %s243
        %s245 = sand.u32 %s147, 1
        %s246 = smul.addr %s245, 16
        %s247 = scalar_lea.vmem [#allocation4], %s246
        %p248 = scmp.lt.s32.totalorder %s19, 1
        %s249 = scalar_select %p248, %s19, 1
        %s250 = smul.addr %s249, 2
        %s251 = smul.addr %s250, 8
        %s252 = scalar_lea.vmem %s0, %s251
        %p253 = scmp.lt.s32.totalorder %s19, 1
        %s254 = scalar_select %p253, %s19, 1
        %s255 = smul.addr %s254, 2
        %s256 = smul.addr %s255, 8
        %s257 = scalar_lea.vmem %s1, %s256
        %p258 = scmp.lt.s32.totalorder %s19, 1
        %s259 = scalar_select %p258, %s19, 1
        %s260 = smul.addr %s259, 2
        %s261 = smul.addr %s260, 8
        %s262 = scalar_lea.vmem %s2, %s261
        %v263 = vld [vmem:[%s252] sm:$0xff]
        %v264 = vld [vmem:[%s252 + $0x8] sm:$0xff]
        %v265 = vld [vmem:[%s257] sm:$0xff]
        %v266 = vld [vmem:[%s257 + $0x8] sm:$0xff]
        %v267 = vld [vmem:[%s262] sm:$0xff]
        %v268 = vld [vmem:[%s262 + $0x8] sm:$0xff]
        %vm269 = vcmask 64512
        %270 = vst.msk [vmem:[#allocation2] sm:$0xff] %vm269, %v267
        %271 = vst.msk [vmem:[#allocation2 + $0x8] sm:$0xff] %vm269, %v268
        %273 = vset.pattern.permute.xlu0 0
        %274 = vperm.xlu0 %273, %v265
        %v275 = vpop.permute.xlu0 %274
        %278 = vset.pattern.permute.xlu0 0
        %279 = vperm.xlu0 %278, %v266
        %v280 = vpop.permute.xlu0 %279
        %v282 = vmul.f32 %v275, %v267
        %v283 = vmul.f32 %v280, %v268
        %vm284 = vcmask 130048
        %v286 = vsel %vm284, %v263, 0
        %v289 = vsel %vm284, %v264, 0
        %291 = vmatprep.subr.mxu0 0.0
        %292 = vmatpush1.msra.mxu0 0.0
        %293 = vmatprep.subr.mxu0 0.0
        %294 = vmatpush1.msra.mxu0 0.0
        %295 = vmatprep.subr.mxu0 0.0
        %296 = vmatpush1.msra.mxu0 0.0
        %297 = vmatprep.subr.mxu0 0.0
        %298 = vmatpush1.msra.mxu0 0.0
        %299 = vmatprep.subr.mxu0 0.0
        %300 = vmatpush1.msra.mxu0 0.0
        %301 = vmatprep.subr.mxu0 0.0
        %302 = vmatpush1.msra.mxu0 0.0
        %303 = vmatprep.subr.mxu0 0.0
        %304 = vmatpush1.msra.mxu0 0.0
        %305 = vmatprep.subr.mxu0 0.0
        %306 = vmatpush1.msra.mxu0 0.0
        %307 = vmatprep.subr.mxu0 0.0
        %308 = vmatpush1.msra.mxu0 0.0
        %309 = vmatprep.subr.mxu0 0.0
        %310 = vmatpush1.msra.mxu0 0.0
        %311 = vmatprep.subr.mxu0 0.0
        %312 = vmatpush1.msra.mxu0 0.0
        %313 = vmatprep.subr.mxu0 0.0
        %314 = vmatpush1.msra.mxu0 0.0
        %315 = vmatprep.subr.mxu0 0.0
        %316 = vmatpush1.msra.mxu0 0.0
        %317 = vmatprep.subr.mxu0 0.0
        %318 = vmatpush1.msra.mxu0 0.0
        %319 = vmatprep.subr.mxu0 0.0
        %320 = vmatpush1.msra.mxu0 %v268
        %321 = vmatprep.subr.mxu0 0.0
        %322 = vmatpush1.msra.mxu0 %v267
        %323 = vmatprep.subr.mxu0 0.0
        %324 = vmatpush2.msra.mxu0 0.0
        %325 = vmatprep.subr.mxu0 0.0
        %326 = vmatpush2.msra.mxu0 0.0
        %327 = vmatprep.subr.mxu0 0.0
        %328 = vmatpush2.msra.mxu0 0.0
        %329 = vmatprep.subr.mxu0 0.0
        %330 = vmatpush2.msra.mxu0 0.0
        %331 = vmatprep.subr.mxu0 0.0
        %332 = vmatpush2.msra.mxu0 0.0
        %333 = vmatprep.subr.mxu0 0.0
        %334 = vmatpush2.msra.mxu0 0.0
        %335 = vmatprep.subr.mxu0 0.0
        %336 = vmatpush2.msra.mxu0 0.0
        %337 = vmatprep.subr.mxu0 0.0
        %338 = vmatpush2.msra.mxu0 0.0
        %339 = vmatprep.subr.mxu0 0.0
        %340 = vmatpush2.msra.mxu0 0.0
        %341 = vmatprep.subr.mxu0 0.0
        %342 = vmatpush2.msra.mxu0 0.0
        %343 = vmatprep.subr.mxu0 0.0
        %344 = vmatpush2.msra.mxu0 0.0
        %345 = vmatprep.subr.mxu0 0.0
        %346 = vmatpush2.msra.mxu0 0.0
        %347 = vmatprep.subr.mxu0 0.0
        %348 = vmatpush2.msra.mxu0 0.0
        %349 = vmatprep.subr.mxu0 0.0
        %350 = vmatpush2.msra.mxu0 0.0
        %351 = vmatprep.subr.mxu0 0.0
        %352 = vmatpush2.msra.mxu0 0.0
        %353 = vmatprep.subr.mxu0 0.0
        %354 = vmatpush2.msra.mxu0 0.0
        %355 = vmatprep.mubr.f32.mxu0 0.0
        %356 = vmatmul.mubr.f32.gmra.mxu0 %v286
        %v357 = vpop.f32.mrf.mxu0
        %v358 = vadd.f32 0.0, %v357
        %v359 = vpop.f32.mrf.mxu0
        %360 = vmatprep.mubr.f32.mxu0 0.0
        %361 = vmatmul.mubr.f32.gmra.mxu0 %v289
        %v362 = vpop.f32.mrf.mxu0
        %v363 = vadd.f32 0.0, %v362
        %v364 = vpop.f32.mrf.mxu0
        %365 = vdwg.mxu0
        %v366 = vsub.f32 %v282, %v358
        %v367 = vsub.f32 %v283, %v363
        %370 = vrot.lane.b32.xlu0 %v366, 8
        %v371 = vpop.permute.xlu0 %370
        %372 = vrot.lane.b32.xlu0 %v367, 8
        %v373 = vpop.permute.xlu0 %372
        %vm376 = vcmask 130112
        %377 = vst.msk [vmem:[#allocation2] sm:$0xff] %vm376, %v371
        %378 = vst.msk [vmem:[#allocation2 + $0x8] sm:$0xff] %vm376, %v373
        %v379 = vmul.f32 %v275, %v366
        %v380 = vmul.f32 %v280, %v367
        %381 = vmatprep.subr.mxu0 0.0
        %382 = vmatpush1.msra.mxu0 0.0
        %383 = vmatprep.subr.mxu0 0.0
        %384 = vmatpush1.msra.mxu0 0.0
        %385 = vmatprep.subr.mxu0 0.0
        %386 = vmatpush1.msra.mxu0 0.0
        %387 = vmatprep.subr.mxu0 0.0
        %388 = vmatpush1.msra.mxu0 0.0
        %389 = vmatprep.subr.mxu0 0.0
        %390 = vmatpush1.msra.mxu0 0.0
        %391 = vmatprep.subr.mxu0 0.0
        %392 = vmatpush1.msra.mxu0 0.0
        %393 = vmatprep.subr.mxu0 0.0
        %394 = vmatpush1.msra.mxu0 0.0
        %395 = vmatprep.subr.mxu0 0.0
        %396 = vmatpush1.msra.mxu0 0.0
        %397 = vmatprep.subr.mxu0 0.0
        %398 = vmatpush1.msra.mxu0 0.0
        %399 = vmatprep.subr.mxu0 0.0
        %400 = vmatpush1.msra.mxu0 0.0
        %401 = vmatprep.subr.mxu0 0.0
        %402 = vmatpush1.msra.mxu0 0.0
        %403 = vmatprep.subr.mxu0 0.0
        %404 = vmatpush1.msra.mxu0 0.0
        %405 = vmatprep.subr.mxu0 0.0
        %406 = vmatpush1.msra.mxu0 0.0
        %407 = vmatprep.subr.mxu0 0.0
        %408 = vmatpush1.msra.mxu0 0.0
        %409 = vmatprep.subr.mxu0 0.0
        %410 = vmatpush1.msra.mxu0 %v367
        %411 = vmatprep.subr.mxu0 0.0
        %412 = vmatpush1.msra.mxu0 %v366
        %413 = vmatprep.subr.mxu0 0.0
        %414 = vmatpush2.msra.mxu0 0.0
        %415 = vmatprep.subr.mxu0 0.0
        %416 = vmatpush2.msra.mxu0 0.0
        %417 = vmatprep.subr.mxu0 0.0
        %418 = vmatpush2.msra.mxu0 0.0
        %419 = vmatprep.subr.mxu0 0.0
        %420 = vmatpush2.msra.mxu0 0.0
        %421 = vmatprep.subr.mxu0 0.0
        %422 = vmatpush2.msra.mxu0 0.0
        %423 = vmatprep.subr.mxu0 0.0
        %424 = vmatpush2.msra.mxu0 0.0
        %425 = vmatprep.subr.mxu0 0.0
        %426 = vmatpush2.msra.mxu0 0.0
        %427 = vmatprep.subr.mxu0 0.0
        %428 = vmatpush2.msra.mxu0 0.0
        %429 = vmatprep.subr.mxu0 0.0
        %430 = vmatpush2.msra.mxu0 0.0
        %431 = vmatprep.subr.mxu0 0.0
        %432 = vmatpush2.msra.mxu0 0.0
        %433 = vmatprep.subr.mxu0 0.0
        %434 = vmatpush2.msra.mxu0 0.0
        %435 = vmatprep.subr.mxu0 0.0
        %436 = vmatpush2.msra.mxu0 0.0
        %437 = vmatprep.subr.mxu0 0.0
        %438 = vmatpush2.msra.mxu0 0.0
        %439 = vmatprep.subr.mxu0 0.0
        %440 = vmatpush2.msra.mxu0 0.0
        %441 = vmatprep.subr.mxu0 0.0
        %442 = vmatpush2.msra.mxu0 0.0
        %443 = vmatprep.subr.mxu0 0.0
        %444 = vmatpush2.msra.mxu0 0.0
        %445 = vmatprep.mubr.f32.mxu0 0.0
        %446 = vmatmul.mubr.f32.gmra.mxu0 %v286
        %v447 = vpop.f32.mrf.mxu0
        %v448 = vadd.f32 0.0, %v447
        %v449 = vpop.f32.mrf.mxu0
        %450 = vmatprep.mubr.f32.mxu0 0.0
        %451 = vmatmul.mubr.f32.gmra.mxu0 %v289
        %v452 = vpop.f32.mrf.mxu0
        %v453 = vadd.f32 0.0, %v452
        %v454 = vpop.f32.mrf.mxu0
        %455 = vdwg.mxu0
        %v456 = vsub.f32 %v379, %v448
        %v457 = vsub.f32 %v380, %v453
        %v458 = vmul.f32 %v456, 2.0
        %v459 = vmul.f32 %v457, 2.0
        %v460 = vsub.f32 %v458, %v267
        %v461 = vsub.f32 %v459, %v268
        %464 = vrot.lane.b32.xlu0 %v460, 16
        %v465 = vpop.permute.xlu0 %464
        %466 = vrot.lane.b32.xlu0 %v461, 16
        %v467 = vpop.permute.xlu0 %466
        %vm470 = vcmask 195712
        %471 = vst.msk [vmem:[#allocation2] sm:$0xff] %vm470, %v465
        %472 = vst.msk [vmem:[#allocation2 + $0x8] sm:$0xff] %vm470, %v467
        %v473 = vld [vmem:[#allocation2] sm:$0xff]
        %v474 = vld [vmem:[#allocation2 + $0x8] sm:$0xff]
        %v475 = vld [vmem:[%s3] sm:$0xff]
        %v476 = vld [vmem:[%s3 + $0x8] sm:$0xff]
        %v477 = vld [vmem:[%s3 + $0x10] sm:$0xff]
        %vm478 = vcmask 195584
        %v480 = vsel %vm478, %v473, 0
        %v483 = vsel %vm478, %v474, 0
        %485 = vmatprep.subr.mxu0 0.0
        %486 = vmatpush1.msra.mxu0 0.0
        %487 = vmatprep.subr.mxu0 0.0
        %488 = vmatpush1.msra.mxu0 0.0
        %489 = vmatprep.subr.mxu0 0.0
        %490 = vmatpush1.msra.mxu0 0.0
        %491 = vmatprep.subr.mxu0 0.0
        %492 = vmatpush1.msra.mxu0 0.0
        %493 = vmatprep.subr.mxu0 0.0
        %494 = vmatpush1.msra.mxu0 0.0
        %495 = vmatprep.subr.mxu0 0.0
        %496 = vmatpush1.msra.mxu0 0.0
        %497 = vmatprep.subr.mxu0 0.0
        %498 = vmatpush1.msra.mxu0 0.0
        %499 = vmatprep.subr.mxu0 0.0
        %500 = vmatpush1.msra.mxu0 0.0
        %501 = vmatprep.subr.mxu0 0.0
        %502 = vmatpush1.msra.mxu0 0.0
        %503 = vmatprep.subr.mxu0 0.0
        %504 = vmatpush1.msra.mxu0 0.0
        %505 = vmatprep.subr.mxu0 0.0
        %506 = vmatpush1.msra.mxu0 0.0
        %507 = vmatprep.subr.mxu0 0.0
        %508 = vmatpush1.msra.mxu0 0.0
        %509 = vmatprep.subr.mxu0 0.0
        %510 = vmatpush1.msra.mxu0 0.0
        %511 = vmatprep.subr.mxu0 0.0
        %512 = vmatpush1.msra.mxu0 %v477
        %513 = vmatprep.subr.mxu0 0.0
        %514 = vmatpush1.msra.mxu0 %v476
        %515 = vmatprep.subr.mxu0 0.0
        %516 = vmatpush1.msra.mxu0 %v475
        %517 = vmatprep.subr.mxu0 0.0
        %518 = vmatpush2.msra.mxu0 0.0
        %519 = vmatprep.subr.mxu0 0.0
        %520 = vmatpush2.msra.mxu0 0.0
        %521 = vmatprep.subr.mxu0 0.0
        %522 = vmatpush2.msra.mxu0 0.0
        %523 = vmatprep.subr.mxu0 0.0
        %524 = vmatpush2.msra.mxu0 0.0
        %525 = vmatprep.subr.mxu0 0.0
        %526 = vmatpush2.msra.mxu0 0.0
        %527 = vmatprep.subr.mxu0 0.0
        %528 = vmatpush2.msra.mxu0 0.0
        %529 = vmatprep.subr.mxu0 0.0
        %530 = vmatpush2.msra.mxu0 0.0
        %531 = vmatprep.subr.mxu0 0.0
        %532 = vmatpush2.msra.mxu0 0.0
        %533 = vmatprep.subr.mxu0 0.0
        %534 = vmatpush2.msra.mxu0 0.0
        %535 = vmatprep.subr.mxu0 0.0
        %536 = vmatpush2.msra.mxu0 0.0
        %537 = vmatprep.subr.mxu0 0.0
        %538 = vmatpush2.msra.mxu0 0.0
        %539 = vmatprep.subr.mxu0 0.0
        %540 = vmatpush2.msra.mxu0 0.0
        %541 = vmatprep.subr.mxu0 0.0
        %542 = vmatpush2.msra.mxu0 0.0
        %543 = vmatprep.subr.mxu0 0.0
        %544 = vmatpush2.msra.mxu0 0.0
        %545 = vmatprep.subr.mxu0 0.0
        %546 = vmatpush2.msra.mxu0 0.0
        %547 = vmatprep.subr.mxu0 0.0
        %548 = vmatpush2.msra.mxu0 0.0
        %549 = vmatprep.mubr.f32.mxu0 0.0
        %550 = vmatmul.mubr.f32.gmra.mxu0 %v480
        %v551 = vpop.f32.mrf.mxu0
        %v552 = vadd.f32 0.0, %v551
        %v553 = vpop.f32.mrf.mxu0
        %554 = vmatprep.mubr.f32.mxu0 0.0
        %555 = vmatmul.mubr.f32.gmra.mxu0 %v483
        %v556 = vpop.f32.mrf.mxu0
        %v557 = vadd.f32 0.0, %v556
        %v558 = vpop.f32.mrf.mxu0
        %559 = vdwg.mxu0
        %v560 = vmul.f32 %v552, 0.5
        %v561 = vmul.f32 %v557, 0.5
        %v562 = vmul.f32 %v552, 0.70710677
        %v563 = vmul.f32 %v557, 0.70710677
        %v564 = verf.f32.pop %v562
        %v565 = verf.f32.pop %v563
        %v566 = vadd.f32 %v564, 1.0
        %v567 = vadd.f32 %v565, 1.0
        %v568 = vmul.f32 %v560, %v566
        %v569 = vmul.f32 %v561, %v567
        %vm570 = vcmask 261120
        %571 = vst.msk [vmem:[#allocation3] sm:$0xff] %vm570, %v568
        %572 = vst.msk [vmem:[#allocation3 + $0x8] sm:$0xff] %vm570, %v569
        %v573 = vmul.f32 %v275, %v568
        %v574 = vmul.f32 %v280, %v569
        %575 = vmatprep.subr.mxu0 0.0
        %576 = vmatpush1.msra.mxu0 0.0
        %577 = vmatprep.subr.mxu0 0.0
        %578 = vmatpush1.msra.mxu0 0.0
        %579 = vmatprep.subr.mxu0 0.0
        %580 = vmatpush1.msra.mxu0 0.0
        %581 = vmatprep.subr.mxu0 0.0
        %582 = vmatpush1.msra.mxu0 0.0
        %583 = vmatprep.subr.mxu0 0.0
        %584 = vmatpush1.msra.mxu0 0.0
        %585 = vmatprep.subr.mxu0 0.0
        %586 = vmatpush1.msra.mxu0 0.0
        %587 = vmatprep.subr.mxu0 0.0
        %588 = vmatpush1.msra.mxu0 0.0
        %589 = vmatprep.subr.mxu0 0.0
        %590 = vmatpush1.msra.mxu0 0.0
        %591 = vmatprep.subr.mxu0 0.0
        %592 = vmatpush1.msra.mxu0 0.0
        %593 = vmatprep.subr.mxu0 0.0
        %594 = vmatpush1.msra.mxu0 0.0
        %595 = vmatprep.subr.mxu0 0.0
        %596 = vmatpush1.msra.mxu0 0.0
        %597 = vmatprep.subr.mxu0 0.0
        %598 = vmatpush1.msra.mxu0 0.0
        %599 = vmatprep.subr.mxu0 0.0
        %600 = vmatpush1.msra.mxu0 0.0
        %601 = vmatprep.subr.mxu0 0.0
        %602 = vmatpush1.msra.mxu0 0.0
        %603 = vmatprep.subr.mxu0 0.0
        %604 = vmatpush1.msra.mxu0 %v569
        %605 = vmatprep.subr.mxu0 0.0
        %606 = vmatpush1.msra.mxu0 %v568
        %607 = vmatprep.subr.mxu0 0.0
        %608 = vmatpush2.msra.mxu0 0.0
        %609 = vmatprep.subr.mxu0 0.0
        %610 = vmatpush2.msra.mxu0 0.0
        %611 = vmatprep.subr.mxu0 0.0
        %612 = vmatpush2.msra.mxu0 0.0
        %613 = vmatprep.subr.mxu0 0.0
        %614 = vmatpush2.msra.mxu0 0.0
        %615 = vmatprep.subr.mxu0 0.0
        %616 = vmatpush2.msra.mxu0 0.0
        %617 = vmatprep.subr.mxu0 0.0
        %618 = vmatpush2.msra.mxu0 0.0
        %619 = vmatprep.subr.mxu0 0.0
        %620 = vmatpush2.msra.mxu0 0.0
        %621 = vmatprep.subr.mxu0 0.0
        %622 = vmatpush2.msra.mxu0 0.0
        %623 = vmatprep.subr.mxu0 0.0
        %624 = vmatpush2.msra.mxu0 0.0
        %625 = vmatprep.subr.mxu0 0.0
        %626 = vmatpush2.msra.mxu0 0.0
        %627 = vmatprep.subr.mxu0 0.0
        %628 = vmatpush2.msra.mxu0 0.0
        %629 = vmatprep.subr.mxu0 0.0
        %630 = vmatpush2.msra.mxu0 0.0
        %631 = vmatprep.subr.mxu0 0.0
        %632 = vmatpush2.msra.mxu0 0.0
        %633 = vmatprep.subr.mxu0 0.0
        %634 = vmatpush2.msra.mxu0 0.0
        %635 = vmatprep.subr.mxu0 0.0
        %636 = vmatpush2.msra.mxu0 0.0
        %637 = vmatprep.subr.mxu0 0.0
        %638 = vmatpush2.msra.mxu0 0.0
        %639 = vmatprep.mubr.f32.mxu0 0.0
        %640 = vmatmul.mubr.f32.gmra.mxu0 %v286
        %v641 = vpop.f32.mrf.mxu0
        %v642 = vadd.f32 0.0, %v641
        %v643 = vpop.f32.mrf.mxu0
        %644 = vmatprep.mubr.f32.mxu0 0.0
        %645 = vmatmul.mubr.f32.gmra.mxu0 %v289
        %v646 = vpop.f32.mrf.mxu0
        %v647 = vadd.f32 0.0, %v646
        %v648 = vpop.f32.mrf.mxu0
        %649 = vdwg.mxu0
        %v650 = vsub.f32 %v573, %v642
        %v651 = vsub.f32 %v574, %v647
        %654 = vrot.lane.b32.xlu0 %v650, 32
        %v655 = vpop.permute.xlu0 %654
        %656 = vrot.lane.b32.xlu0 %v651, 32
        %v657 = vpop.permute.xlu0 %656
        %vm660 = vcmask 523520
        %661 = vst.msk [vmem:[#allocation3] sm:$0xff] %vm660, %v655
        %662 = vst.msk [vmem:[#allocation3 + $0x8] sm:$0xff] %vm660, %v657
        %v663 = vmul.f32 %v275, %v650
        %v664 = vmul.f32 %v280, %v651
        %665 = vmatprep.subr.mxu0 0.0
        %666 = vmatpush1.msra.mxu0 0.0
        %667 = vmatprep.subr.mxu0 0.0
        %668 = vmatpush1.msra.mxu0 0.0
        %669 = vmatprep.subr.mxu0 0.0
        %670 = vmatpush1.msra.mxu0 0.0
        %671 = vmatprep.subr.mxu0 0.0
        %672 = vmatpush1.msra.mxu0 0.0
        %673 = vmatprep.subr.mxu0 0.0
        %674 = vmatpush1.msra.mxu0 0.0
        %675 = vmatprep.subr.mxu0 0.0
        %676 = vmatpush1.msra.mxu0 0.0
        %677 = vmatprep.subr.mxu0 0.0
        %678 = vmatpush1.msra.mxu0 0.0
        %679 = vmatprep.subr.mxu0 0.0
        %680 = vmatpush1.msra.mxu0 0.0
        %681 = vmatprep.subr.mxu0 0.0
        %682 = vmatpush1.msra.mxu0 0.0
        %683 = vmatprep.subr.mxu0 0.0
        %684 = vmatpush1.msra.mxu0 0.0
        %685 = vmatprep.subr.mxu0 0.0
        %686 = vmatpush1.msra.mxu0 0.0
        %687 = vmatprep.subr.mxu0 0.0
        %688 = vmatpush1.msra.mxu0 0.0
        %689 = vmatprep.subr.mxu0 0.0
        %690 = vmatpush1.msra.mxu0 0.0
        %691 = vmatprep.subr.mxu0 0.0
        %692 = vmatpush1.msra.mxu0 0.0
        %693 = vmatprep.subr.mxu0 0.0
        %694 = vmatpush1.msra.mxu0 %v651
        %695 = vmatprep.subr.mxu0 0.0
        %696 = vmatpush1.msra.mxu0 %v650
        %697 = vmatprep.subr.mxu0 0.0
        %698 = vmatpush2.msra.mxu0 0.0
        %699 = vmatprep.subr.mxu0 0.0
        %700 = vmatpush2.msra.mxu0 0.0
        %701 = vmatprep.subr.mxu0 0.0
        %702 = vmatpush2.msra.mxu0 0.0
        %703 = vmatprep.subr.mxu0 0.0
        %704 = vmatpush2.msra.mxu0 0.0
        %705 = vmatprep.subr.mxu0 0.0
        %706 = vmatpush2.msra.mxu0 0.0
        %707 = vmatprep.subr.mxu0 0.0
        %708 = vmatpush2.msra.mxu0 0.0
        %709 = vmatprep.subr.mxu0 0.0
        %710 = vmatpush2.msra.mxu0 0.0
        %711 = vmatprep.subr.mxu0 0.0
        %712 = vmatpush2.msra.mxu0 0.0
        %713 = vmatprep.subr.mxu0 0.0
        %714 = vmatpush2.msra.mxu0 0.0
        %715 = vmatprep.subr.mxu0 0.0
        %716 = vmatpush2.msra.mxu0 0.0
        %717 = vmatprep.subr.mxu0 0.0
        %718 = vmatpush2.msra.mxu0 0.0
        %719 = vmatprep.subr.mxu0 0.0
        %720 = vmatpush2.msra.mxu0 0.0
        %721 = vmatprep.subr.mxu0 0.0
        %722 = vmatpush2.msra.mxu0 0.0
        %723 = vmatprep.subr.mxu0 0.0
        %724 = vmatpush2.msra.mxu0 0.0
        %725 = vmatprep.subr.mxu0 0.0
        %726 = vmatpush2.msra.mxu0 0.0
        %727 = vmatprep.subr.mxu0 0.0
        %728 = vmatpush2.msra.mxu0 0.0
        %729 = vmatprep.mubr.f32.mxu0 0.0
        %730 = vmatmul.mubr.f32.gmra.mxu0 %v286
        %v731 = vpop.f32.mrf.mxu0
        %v732 = vadd.f32 0.0, %v731
        %v733 = vpop.f32.mrf.mxu0
        %734 = vmatprep.mubr.f32.mxu0 0.0
        %735 = vmatmul.mubr.f32.gmra.mxu0 %v289
        %v736 = vpop.f32.mrf.mxu0
        %v737 = vadd.f32 0.0, %v736
        %v738 = vpop.f32.mrf.mxu0
        %739 = vdwg.mxu0
        %v740 = vsub.f32 %v663, %v732
        %v741 = vsub.f32 %v664, %v737
        %v742 = vmul.f32 %v740, 2.0
        %v743 = vmul.f32 %v741, 2.0
        %v744 = vsub.f32 %v742, %v568
        %v745 = vsub.f32 %v743, %v569
        %748 = vrot.lane.b32.xlu0 %v744, 64
        %v749 = vpop.permute.xlu0 %748
        %750 = vrot.lane.b32.xlu0 %v745, 64
        %v751 = vpop.permute.xlu0 %750
        %vm754 = vcmask 785920
        %755 = vst.msk [vmem:[#allocation3] sm:$0xff] %vm754, %v749
        %756 = vst.msk [vmem:[#allocation3 + $0x8] sm:$0xff] %vm754, %v751
        %v757 = vld [vmem:[#allocation3] sm:$0xff]
        %v758 = vld [vmem:[#allocation3 + $0x8] sm:$0xff]
        %v759 = vld [vmem:[%s4] sm:$0xff]
        %v760 = vld [vmem:[%s4 + $0x8] sm:$0xff]
        %v761 = vld [vmem:[%s4 + $0x10] sm:$0xff]
        %v762 = vld [vmem:[%s4 + $0x18] sm:$0xff]
        %v763 = vld [vmem:[%s4 + $0x20] sm:$0xff]
        %v764 = vld [vmem:[%s4 + $0x28] sm:$0xff]
        %v765 = vld [vmem:[%s4 + $0x30] sm:$0xff]
        %v766 = vld [vmem:[%s4 + $0x38] sm:$0xff]
        %v767 = vld [vmem:[%s4 + $0x40] sm:$0xff]
        %v768 = vld [vmem:[%s4 + $0x48] sm:$0xff]
        %v769 = vld [vmem:[%s4 + $0x50] sm:$0xff]
        %v770 = vld [vmem:[%s4 + $0x58] sm:$0xff]
        %vm771 = vcmask 785408
        %v773 = vsel %vm771, %v757, 0
        %v776 = vsel %vm771, %v758, 0
        %778 = vmatprep.subr.mxu0 0.0
        %779 = vmatpush1.msra.mxu0 0.0
        %780 = vmatprep.subr.mxu0 0.0
        %781 = vmatpush1.msra.mxu0 0.0
        %782 = vmatprep.subr.mxu0 0.0
        %783 = vmatpush1.msra.mxu0 0.0
        %784 = vmatprep.subr.mxu0 0.0
        %785 = vmatpush1.msra.mxu0 0.0
        %786 = vmatprep.subr.mxu0 0.0
        %787 = vmatpush1.msra.mxu0 %v770
        %788 = vmatprep.subr.mxu0 0.0
        %789 = vmatpush1.msra.mxu0 %v769
        %790 = vmatprep.subr.mxu0 0.0
        %791 = vmatpush1.msra.mxu0 %v768
        %792 = vmatprep.subr.mxu0 0.0
        %793 = vmatpush1.msra.mxu0 %v767
        %794 = vmatprep.subr.mxu0 0.0
        %795 = vmatpush1.msra.mxu0 %v766
        %796 = vmatprep.subr.mxu0 0.0
        %797 = vmatpush1.msra.mxu0 %v765
        %798 = vmatprep.subr.mxu0 0.0
        %799 = vmatpush1.msra.mxu0 %v764
        %800 = vmatprep.subr.mxu0 0.0
        %801 = vmatpush1.msra.mxu0 %v763
        %802 = vmatprep.subr.mxu0 0.0
        %803 = vmatpush1.msra.mxu0 %v762
        %804 = vmatprep.subr.mxu0 0.0
        %805 = vmatpush1.msra.mxu0 %v761
        %806 = vmatprep.subr.mxu0 0.0
        %807 = vmatpush1.msra.mxu0 %v760
        %808 = vmatprep.subr.mxu0 0.0
        %809 = vmatpush1.msra.mxu0 %v759
        %810 = vmatprep.subr.mxu0 0.0
        %811 = vmatpush2.msra.mxu0 0.0
        %812 = vmatprep.subr.mxu0 0.0
        %813 = vmatpush2.msra.mxu0 0.0
        %814 = vmatprep.subr.mxu0 0.0
        %815 = vmatpush2.msra.mxu0 0.0
        %816 = vmatprep.subr.mxu0 0.0
        %817 = vmatpush2.msra.mxu0 0.0
        %818 = vmatprep.subr.mxu0 0.0
        %819 = vmatpush2.msra.mxu0 0.0
        %820 = vmatprep.subr.mxu0 0.0
        %821 = vmatpush2.msra.mxu0 0.0
        %822 = vmatprep.subr.mxu0 0.0
        %823 = vmatpush2.msra.mxu0 0.0
        %824 = vmatprep.subr.mxu0 0.0
        %825 = vmatpush2.msra.mxu0 0.0
        %826 = vmatprep.subr.mxu0 0.0
        %827 = vmatpush2.msra.mxu0 0.0
        %828 = vmatprep.subr.mxu0 0.0
        %829 = vmatpush2.msra.mxu0 0.0
        %830 = vmatprep.subr.mxu0 0.0
        %831 = vmatpush2.msra.mxu0 0.0
        %832 = vmatprep.subr.mxu0 0.0
        %833 = vmatpush2.msra.mxu0 0.0
        %834 = vmatprep.subr.mxu0 0.0
        %835 = vmatpush2.msra.mxu0 0.0
        %836 = vmatprep.subr.mxu0 0.0
        %837 = vmatpush2.msra.mxu0 0.0
        %838 = vmatprep.subr.mxu0 0.0
        %839 = vmatpush2.msra.mxu0 0.0
        %840 = vmatprep.subr.mxu0 0.0
        %841 = vmatpush2.msra.mxu0 0.0
        %842 = vmatprep.mubr.f32.mxu0 0.0
        %843 = vmatmul.mubr.f32.gmra.mxu0 %v773
        %v844 = vpop.f32.mrf.mxu0
        %v845 = vadd.f32 0.0, %v844
        %v846 = vpop.f32.mrf.mxu0
        %847 = vmatprep.mubr.f32.mxu0 0.0
        %848 = vmatmul.mubr.f32.gmra.mxu0 %v776
        %v849 = vpop.f32.mrf.mxu0
        %v850 = vadd.f32 0.0, %v849
        %v851 = vpop.f32.mrf.mxu0
        %852 = vdwg.mxu0
        %853 = vst [vmem:[%s247] sm:$0xff] %v845
        %854 = vst [vmem:[%s247 + $0x8] sm:$0xff] %v850
        %s855 = sand.u32 %s147, 1
        %s856 = scalar_lea.sflag [#allocation5], %s855
        %s857 = sand.u32 %s147, 1
        %s858 = smul.addr %s857, 16
        %s859 = scalar_lea.vmem [#allocation4], %s858
        // Predicated region
        $region41: #{chebnet_forward.1} parent=39 // pred_check
          %p860 = pneg %p157
        $region42: #{chebnet_forward.1} parent=39 // pred_check_branch
          %862 = sbr.rel (%p860) target = $region44
        $region43: #{chebnet_forward.1} parent=39 // pred_region
          %s864 = ssub.s32 256, 256
          %865 = vsyncadd %s856, %s864
          %s866 = smul.addr %s19, 2
          %s867 = smul.addr %s866, 128
          %s868 = scalar_lea.hbm %s5, %s867
          %s869 = sshll.u32 %s859, 4
          %s870 = int_to_ptr.vmem [resolvable:$true] %s869
          %875 = dma.vmem_to_hbm [thread:$0]  %s870, 256, %s868, %s856, 128, 128, 8
        $region44: #{chebnet_forward.1} parent=39 // pred_fallthru
          _
      $region40: #{chebnet_forward.1} parent=5 // pred_fallthru
        _
      %p876 = scmp.le.s32.totalorder 2, %s14
      // Predicated region
      $region45: #{chebnet_forward.1} parent=5 // pred_check
        %p877 = pneg %p876
      $region46: #{chebnet_forward.1} parent=5 // pred_check_branch
        %879 = sbr.rel (%p877) target = $region48
      $region47: #{chebnet_forward.1} parent=5 // pred_region
        %s880 = ssub.s32 %s14, 2
        // Predicated region
        $region49: #{chebnet_forward.1} parent=47 // pred_check
          %p881 = pneg %p163
        $region50: #{chebnet_forward.1} parent=47 // pred_check_branch
          %883 = sbr.rel (%p881) target = $region52
        $region51: #{chebnet_forward.1} parent=47 // pred_region
          %s884 = sand.u32 %s148, 1
          %s885 = scalar_lea.sflag [#allocation5], %s884
          %s886 = sand.u32 %s148, 1
          %s887 = smul.addr %s886, 16
          %s888 = scalar_lea.vmem [#allocation4], %s887
          %889 = dma.done %s885, 256
        $region52: #{chebnet_forward.1} parent=47 // pred_fallthru
          _
      $region48: #{chebnet_forward.1} parent=5 // pred_fallthru
        _
    $region6: #{chebnet_forward.1} parent=1 // loop_footer
      %s18 = sadd.s32 1, %s14
    $region7: #{chebnet_forward.1} parent=1 // loop_footer_branch
      %13 = sbr.rel target = $region3
    $region8: #{chebnet_forward.1} parent=1 // loop_exit
      _
    %890 = vsyncpa [#allocation5], 1
    %s891 = scalar_lea.sflag [#allocation5], 1
    %892 = vsyncpa %s891, 1

</llo_original>
